<compile_context>
chip_gen: v5e
topology: v5e:2x2
jax: 0.10.0
libtpu: 0.0.40
codegen_flags: <defaults>
</compile_context>

<pallas_src>
import jax
import jax.numpy as jnp
from jax.experimental import pallas as pl
from jax.experimental.pallas import tpu as pltpu

ANCHORS_PER_ROW = 128            # one lane-packed "row" = 128 anchors
LANES = ANCHORS_PER_ROW * 7      # 896 lanes per row (multiple of 128)
MAX_TILE_ROWS = 512              # 512 rows * 128 anchors = 65536 anchors / grid step
CHUNK_ROWS = 64                  # in-kernel chunking bounds live temporaries


def _cdiv(a, b):
    return (a + b - 1) // b


def _round_up(a, b):
    return _cdiv(a, b) * b


# -----------------------------------------------------------------------------
# Lane-shift helper.  We need "shift s lanes toward higher lane indices"
# (jnp.roll) semantics.  pltpu.roll is the cheap XLU op for this; its rotation
# direction is probed once with a tiny pallas_call so the kernel is correct
# either way, with an explicit zero-fill concat shift as a last-resort fallback.
# Every consumer only reads lanes whose shifted-in counterpart is zero, so
# wrap-around values and zero fill are interchangeable.
# -----------------------------------------------------------------------------
_ROLL_MODE = None    # +1: pltpu.roll == jnp.roll, -1: inverted, 0: concat fallback


def _probe_roll_mode():
    global _ROLL_MODE
    if _ROLL_MODE is not None:
        return _ROLL_MODE

    def _probe_kernel(x_ref, o_ref):
        o_ref[...] = pltpu.roll(x_ref[...], 1, 1)

    try:
        x = jnp.arange(8 * 128, dtype=jnp.float32).reshape(8, 128)
        y = pl.pallas_call(
            _probe_kernel,
            out_shape=jax.ShapeDtypeStruct((8, 128), jnp.float32))(x)
        y = jax.block_until_ready(y)
        if bool(jnp.array_equal(y, jnp.roll(x, 1, axis=1))):
            _ROLL_MODE = 1
        elif bool(jnp.array_equal(y, jnp.roll(x, -1, axis=1))):
            _ROLL_MODE = -1
        else:
            _ROLL_MODE = 0
    except Exception:
        _ROLL_MODE = 0
    return _ROLL_MODE


def _shift_lanes(x, s):
    """jnp.roll(x, s, axis=-1) semantics (toward higher lane indices)."""
    if s == 0:
        return x
    axis = x.ndim - 1
    n = x.shape[-1]
    if _ROLL_MODE == 1:
        return pltpu.roll(x, s, axis)
    if _ROLL_MODE == -1:
        return pltpu.roll(x, n - s, axis)        # cyclic: roll(-(n-s)) == roll(s)
    pad = jnp.zeros(x.shape[:-1] + (s,), x.dtype)
    return jnp.concatenate([pad, x[..., :n - s]], axis=axis)


def _fold_rows(x):
    """Sum (R, L) -> (8, L) over 8-row groups with aligned vreg adds (R % 8 == 0)."""
    r = x.shape[0]
    while r > 8:
        if (r // 8) % 2 == 0:
            r //= 2
            x = x[:r] + x[r:]
        else:                                    # peel the last 8 rows into the first 8
            x = jnp.concatenate([x[:8] + x[r - 8:], x[8:r - 8]], axis=0)
            r -= 8
    return x


def _num_tensorcores():
    """Best-effort query of TensorCores per chip (2 on v7x, else 1)."""
    try:
        info = pltpu.get_tpu_info()
        for name in ("num_cores", "core_count", "num_tensorcores",
                     "tensor_core_count", "tensorcores_per_chip",
                     "cores_per_chip", "num_cores_per_chip"):
            v = getattr(info, name, None)
            if isinstance(v, int) and 1 <= v <= 8:
                return v
    except Exception:
        pass
    return 1


def _detector_loss_kernel(out_ref, lab_ref, cls_ref, sl1_ref):
    i = pl.program_id(1)
    tile_rows = out_ref.shape[0]

    # lane % 7 == 0 is the objectness channel of each anchor.
    lane = jax.lax.broadcasted_iota(jnp.int32, (1, LANES), 1)
    is_c0 = (lane % 7) == 0
    # "Doctored" thresholds: one compare both thresholds the objectness label
    # and masks out the six regression lanes of every anchor.
    pos_th = jnp.where(is_c0, 0.5, jnp.inf).astype(jnp.float32)
    neg_th = jnp.where(is_c0, -0.5, -jnp.inf).astype(jnp.float32)

    zeros8 = jnp.zeros((8, LANES), jnp.float32)
    a_bce_pos = zeros8
    a_pos = zeros8
    a_cpos = zeros8
    a_bce_neg = zeros8
    a_neg = zeros8
    a_negwrong = zeros8
    a_sl1 = zeros8

    # Walk the (tile_rows, 896) block in row chunks so live temporaries stay
    # small (bounded VMEM pressure) while the DMA block stays big.
    off = 0
    while off < tile_rows:
        rows = min(CHUNK_ROWS, tile_rows - off)
        o = out_ref[pl.ds(off, rows), :].astype(jnp.float32)
        l = lab_ref[pl.ds(off, rows), :].astype(jnp.float32)
        off += rows

        pos0 = l > pos_th                 # objectness label > 0.5  (ch-0 lanes only)
        neg0 = l < neg_th                 # objectness label < -0.5 (ch-0 lanes only)
        posf = pos0.astype(jnp.float32)
        negf = neg0.astype(jnp.float32)

        # Stable BCE with logits: bce(x, y) = max(x,0) - x*y + log1p(exp(-|x|));
        # negatives use target y+1 and bce(x, y+1) = bce(x, y) - x.
        bce = jnp.maximum(o, 0.0) - o * l + jnp.log1p(jnp.exp(-jnp.abs(o)))
        x_gef = (o >= 0.0).astype(jnp.float32)   # sigmoid(x) >= 0.5  <=>  x >= 0

        # Broadcast each anchor's positive flag from its ch-0 lane to all 7 of
        # its lanes with a 3-shift tree (1, 2, 4); overflow only ever lands on
        # ch-0 lanes, which the regression path never reads.
        p = posf
        p = p + _shift_lanes(p, 1)
        p = p + _shift_lanes(p, 2)
        pos_lane = p + _shift_lanes(p, 4)

        d = o - l
        ad = jnp.abs(d)
        sl1 = jnp.where(ad < 1.0, 0.5 * d * d, ad - 0.5) * pos_lane

        # Fold the chunk rows to 8 sublanes and accumulate into narrow partials.
        a_bce_pos = a_bce_pos + _fold_rows(jnp.where(pos0, bce, 0.0))
        a_pos = a_pos + _fold_rows(posf)
        a_cpos = a_cpos + _fold_rows(posf * x_gef)
        a_bce_neg = a_bce_neg + _fold_rows(jnp.where(neg0, bce - o, 0.0))
        a_neg = a_neg + _fold_rows(negf)
        a_negwrong = a_negwrong + _fold_rows(negf * x_gef)
        a_sl1 = a_sl1 + _fold_rows(sl1)

    # Pack the six classification partials onto distinct lane residues (mod 7)
    # of a single (8, 896) accumulator — five 7-vreg shifts, no concatenates.
    cls_packed = (a_bce_pos
                  + _shift_lanes(a_pos, 1)
                  + _shift_lanes(a_cpos, 2)
                  + _shift_lanes(a_bce_neg, 3)
                  + _shift_lanes(a_neg, 4)
                  + _shift_lanes(a_negwrong, 5))

    @pl.when(i == 0)
    def _():
        cls_ref[...] = jnp.zeros_like(cls_ref)
        sl1_ref[...] = jnp.zeros_like(sl1_ref)

    cls_ref[...] += cls_packed[None, :, :]
    sl1_ref[...] += a_sl1[None, :, :]


def _run_kernel(out2, lab2, num_splits, tile_rows, inner_steps):
    grid = (num_splits, inner_steps)

    def in_map(c, i):
        return (c * inner_steps + i, 0)

    return pl.pallas_call(
        _detector_loss_kernel,
        out_shape=(
            jax.ShapeDtypeStruct((num_splits, 8, LANES), jnp.float32),  # cls stats
            jax.ShapeDtypeStruct((num_splits, 8, LANES), jnp.float32),  # SmoothL1
        ),
        grid_spec=pltpu.PrefetchScalarGridSpec(
            num_scalar_prefetch=0,
            grid=grid,
            in_specs=[
                # Default double-buffering; bump to pipeline_mode=pl.Buffered(3)
                # only if a profile shows exposed DMA.
                pl.BlockSpec((tile_rows, LANES), in_map),
                pl.BlockSpec((tile_rows, LANES), in_map),
            ],
            out_specs=[
                pl.BlockSpec((1, 8, LANES), lambda c, i: (c, 0, 0)),
                pl.BlockSpec((1, 8, LANES), lambda c, i: (c, 0, 0)),
            ],
        ),
        compiler_params=pltpu.CompilerParams(
            dimension_semantics=("parallel", "arbitrary")),
    )(out2, lab2)


def detector_loss(output, labels, num_hard=0, train=True):
    """JAX/Pallas equivalent of DetectorLoss.forward (num_hard=0 path)."""
    # TODO(synk): hard_mining (top-k over negatives) not implemented; with the
    # default num_hard=0 the reference module never executes it either.
    del num_hard, train
    _probe_roll_mode()

    def _keep_dtype(x):
        # f32/bf16 ship as-is (bf16 halves HBM bytes); anything else -> f32.
        return x if x.dtype in (jnp.float32, jnp.bfloat16) else x.astype(jnp.float32)

    out_flat = _keep_dtype(output).reshape(-1)       # free row-major bitcast
    lab_flat = _keep_dtype(labels).reshape(-1)
    total = out_flat.shape[0]
    assert total == lab_flat.shape[0] and total % 7 == 0
    n_anchors = total // 7

    rows = max(1, _cdiv(n_anchors, ANCHORS_PER_ROW))
    num_splits = min(_num_tensorcores(), 2)
    if rows < 2 * 8 * num_splits:
        num_splits = 1                               # too small to shard across TCs
    tile_rows = min(MAX_TILE_ROWS, _round_up(_cdiv(rows, num_splits), 8))
    inner_steps = _cdiv(rows, num_splits * tile_rows)
    rows_pad = num_splits * tile_rows * inner_steps

    pad = rows_pad * LANES - total
    if pad:
        # Only for ragged sizes; padded anchors have label ch0 == 0 ("ignore")
        # so they contribute nothing.
        out_flat = jnp.pad(out_flat, (0, pad))
        lab_flat = jnp.pad(lab_flat, (0, pad))

    out2 = out_flat.reshape(rows_pad, LANES)         # (rows, 128 anchors * 7 ch)
    lab2 = lab_flat.reshape(rows_pad, LANES)

    cls_acc, sl1_acc = _run_kernel(out2, lab2, num_splits, tile_rows, inner_steps)

    cls_tot = jnp.sum(cls_acc, axis=(0, 1))          # (896,)
    sl1_tot = jnp.sum(sl1_acc, axis=(0, 1))          # (896,)
    res = jnp.arange(LANES) % 7

    def _pick(vec, r):
        return jnp.sum(jnp.where(res == r, vec, 0.0))

    sum_bce_pos = _pick(cls_tot, 0)
    pos_count = _pick(cls_tot, 1)
    pos_correct = _pick(cls_tot, 2)
    sum_bce_neg = _pick(cls_tot, 3)
    neg_count = _pick(cls_tot, 4)
    neg_wrong = _pick(cls_tot, 5)                    # negatives predicted positive
    neg_correct = neg_count - neg_wrong
    reg_sums = jnp.stack([_pick(sl1_tot, c) for c in range(1, 7)])

    has_pos = pos_count > 0.0
    safe_pos = jnp.maximum(pos_count, 1.0)
    safe_neg = jnp.maximum(neg_count, 1.0)

    bce_pos_mean = jnp.where(has_pos, sum_bce_pos / safe_pos, 0.0)
    bce_neg_mean = jnp.where(neg_count > 0.0, sum_bce_neg / safe_neg, 0.0)
    classify_loss = jnp.where(has_pos,
                              0.5 * bce_pos_mean + 0.5 * bce_neg_mean,
                              0.5 * bce_neg_mean)

    regress = jnp.where(has_pos, reg_sums / safe_pos, jnp.zeros((6,), jnp.float32))
    loss = classify_loss + jnp.sum(regress)

    return ([loss, classify_loss]
            + [regress[j] for j in range(6)]
            + [pos_correct.astype(jnp.int32),
               jnp.where(has_pos, pos_count, 0.0).astype(jnp.int32),
               neg_correct.astype(jnp.int32),
               neg_count.astype(jnp.int32)])


def _reference_jax(output, labels):
    """Pure-JAX (non-Pallas) reference reproducing the PyTorch semantics."""
    o = output.reshape(-1, 7).astype(jnp.float32)
    l = labels.reshape(-1, 7).astype(jnp.float32)
    pos = l[:, 0] > 0.5
    neg = l[:, 0] < -0.5
    posf = pos.astype(jnp.float32)
    negf = neg.astype(jnp.float32)

    def bce(x, y):
        return jnp.maximum(x, 0.0) - x * y + jnp.log1p(jnp.exp(-jnp.abs(x)))

    npos = jnp.sum(posf)
    nneg = jnp.sum(negf)
    bce_p = jnp.sum(bce(o[:, 0], l[:, 0]) * posf) / jnp.maximum(npos, 1.0)
    bce_n = jnp.sum(bce(o[:, 0], l[:, 0] + 1.0) * negf) / jnp.maximum(nneg, 1.0)
    classify = 0.5 * bce_p + 0.5 * bce_n
    d = o[:, 1:7] - l[:, 1:7]
    ad = jnp.abs(d)
    sl1 = jnp.where(ad < 1.0, 0.5 * d * d, ad - 0.5)
    regress = jnp.sum(sl1 * posf[:, None], axis=0) / jnp.maximum(npos, 1.0)
    loss = classify + jnp.sum(regress)
    prob = jax.nn.sigmoid(o[:, 0])
    return (loss, classify, regress,
            jnp.sum((prob >= 0.5) & pos), npos,
            jnp.sum((prob < 0.5) & neg), nneg)


if __name__ == "__main__":
    key = jax.random.PRNGKey(0)
    B, A = 2, 512  # batch=2, 512 anchors per sample, 7 channels each
    k1, k2, k3 = jax.random.split(key, 3)

    output = jax.random.normal(k1, (B, A, 7), dtype=jnp.float32)

    # labels: channel 0 in {1 (pos), -1 (neg), 0 (ignore)}, channels 1..6 targets
    cls = jax.random.choice(k2, jnp.array([1.0, -1.0, 0.0], jnp.float32),
                            shape=(B, A, 1), p=jnp.array([0.1, 0.7, 0.2]))
    reg = jax.random.normal(k3, (B, A, 6), dtype=jnp.float32)
    labels = jnp.concatenate([cls, reg], axis=-1)

    result = detector_loss(output, labels)
    result = jax.block_until_ready(result)

    # sanity check against a pure-JAX reference
    ref_loss, ref_cls, ref_reg, rpc, rpt, rnc, rnt = _reference_jax(output, labels)
    assert jnp.allclose(result[0], ref_loss, atol=1e-4, rtol=1e-4)
    assert jnp.allclose(result[1], ref_cls, atol=1e-4, rtol=1e-4)
    for j in range(6):
        assert jnp.allclose(result[2 + j], ref_reg[j], atol=1e-4, rtol=1e-4)
    assert int(result[8]) == int(rpc) and int(result[9]) == int(rpt)
    assert int(result[10]) == int(rnc) and int(result[11]) == int(rnt)

    print("KERNEL_OK")
</pallas_src>

<mosaic_0001>
module attributes {stable_mosaic.version = 11 : i64} {
  func.func @_probe_kernel(%arg0: memref<8x128xf32, #tpu.memory_space<vmem>>, %arg1: memref<8x128xf32, #tpu.memory_space<vmem>>) attributes {dimension_semantics = [], scalar_prefetch = 0 : i64, scratch_operands = 0 : i64, tpu.core_type = #tpu.core_type<tc>} {
    %c0 = arith.constant 0 : index
    %c0_0 = arith.constant 0 : index
    %0 = vector.load %arg0[%c0, %c0_0] : memref<8x128xf32, #tpu.memory_space<vmem>>, vector<8x128xf32>
    %c1_i32 = arith.constant 1 : i32
    %1 = tpu.dynamic_rotate %0 by %c1_i32 dim 1 : vector<8x128xf32>, i32 -> vector<8x128xf32>
    %c0_1 = arith.constant 0 : index
    %c0_2 = arith.constant 0 : index
    %2 = vector.load %arg1[%c0_1, %c0_2] : memref<8x128xf32, #tpu.memory_space<vmem>>, vector<8x128xf32>
    tpu.vector_store %arg1[%c0_1, %c0_2], %1 {strides = array<i32>} : memref<8x128xf32, #tpu.memory_space<vmem>>, vector<8x128xf32>,
    return
  }
}

module attributes {stable_mosaic.version = 11 : i64} {
  func.func @_detector_loss_kernel(%arg0: i32, %arg1: i32, %arg2: memref<8x896xf32, #tpu.memory_space<vmem>>, %arg3: memref<8x896xf32, #tpu.memory_space<vmem>>, %arg4: memref<1x8x896xf32, #tpu.memory_space<vmem>>, %arg5: memref<1x8x896xf32, #tpu.memory_space<vmem>>) attributes {dimension_semantics = [#tpu.dimension_semantics<parallel>, #tpu.dimension_semantics<arbitrary>], iteration_bounds = array<i64: 1, 1>, scalar_prefetch = 0 : i64, scratch_operands = 0 : i64, tpu.core_type = #tpu.core_type<tc>, window_params = [{transform_indices = @transform_0, window_bounds = array<i64: 8, 896>}, {transform_indices = @transform_1, window_bounds = array<i64: 8, 896>}, {transform_indices = @transform_2, window_bounds = array<i64: 1, 8, 896>}, {transform_indices = @transform_3, window_bounds = array<i64: 1, 8, 896>}]} {
    %0 = tpu.iota {dimensions = array<i32: 1>} : vector<1x896xi32>
    %c7_i32 = arith.constant 7 : i32
    %c0_i32 = arith.constant 0 : i32
    %1 = arith.cmpi eq, %c7_i32, %c0_i32 : i32
    %c1_i32 = arith.constant 1 : i32
    %2 = arith.select %1, %c1_i32, %c7_i32 : i32
    %3 = vector.broadcast %2 : i32 to vector<1x896xi32>
    %4 = arith.remsi %0, %3 : vector<1x896xi32>
    %c0_i32_0 = arith.constant 0 : i32
    %5 = vector.broadcast %c0_i32_0 : i32 to vector<1x896xi32>
    %6 = arith.cmpi ne, %4, %5 : vector<1x896xi32>
    %c0_i32_1 = arith.constant 0 : i32
    %7 = vector.broadcast %c0_i32_1 : i32 to vector<1x896xi32>
    %8 = arith.cmpi slt, %4, %7 : vector<1x896xi32>
    %c0_i32_2 = arith.constant 0 : i32
    %9 = arith.cmpi slt, %2, %c0_i32_2 : i32
    %10 = vector.broadcast %9 : i1 to vector<1x896xi1>
    %11 = vector.broadcast %10 : vector<1x896xi1> to vector<1x896xi1>
    %12 = arith.xori %8, %11 : vector<1x896xi1>
    %13 = arith.andi %12, %6 : vector<1x896xi1>
    %14 = vector.broadcast %2 : i32 to vector<1x896xi32>
    %15 = arith.addi %4, %14 : vector<1x896xi32>
    %16 = arith.select %13, %15, %4 : vector<1x896xi1>, vector<1x896xi32>
    %c0_i32_3 = arith.constant 0 : i32
    %17 = vector.broadcast %c0_i32_3 : i32 to vector<1x896xi32>
    %18 = arith.cmpi eq, %16, %17 : vector<1x896xi32>
    %cst = arith.constant 5.000000e-01 : f32
    %cst_4 = arith.constant 0x7F800000 : f32
    %19 = vector.broadcast %cst : f32 to vector<1x896xf32>
    %20 = vector.broadcast %cst_4 : f32 to vector<1x896xf32>
    %21 = arith.select %18, %19, %20 : vector<1x896xi1>, vector<1x896xf32>
    %cst_5 = arith.constant -5.000000e-01 : f32
    %cst_6 = arith.constant 0xFF800000 : f32
    %22 = vector.broadcast %cst_5 : f32 to vector<1x896xf32>
    %23 = vector.broadcast %cst_6 : f32 to vector<1x896xf32>
    %24 = arith.select %18, %22, %23 : vector<1x896xi1>, vector<1x896xf32>
    %cst_7 = arith.constant 0.000000e+00 : f32
    %25 = vector.broadcast %cst_7 : f32 to vector<8x896xf32>
    %c0 = arith.constant 0 : index
    %c0_8 = arith.constant 0 : index
    %26 = vector.load %arg2[%c0, %c0_8] : memref<8x896xf32, #tpu.memory_space<vmem>>, vector<8x896xf32>
    %c0_9 = arith.constant 0 : index
    %c0_10 = arith.constant 0 : index
    %27 = vector.load %arg3[%c0_9, %c0_10] : memref<8x896xf32, #tpu.memory_space<vmem>>, vector<8x896xf32>
    %28 = vector.broadcast %21 : vector<1x896xf32> to vector<8x896xf32>
    %29 = arith.cmpf ogt, %27, %28 : vector<8x896xf32>
    %30 = vector.broadcast %24 : vector<1x896xf32> to vector<8x896xf32>
    %31 = arith.cmpf olt, %27, %30 : vector<8x896xf32>
    %32 = arith.extui %29 : vector<8x896xi1> to vector<8x896xi32>
    %33 = arith.sitofp %32 : vector<8x896xi32> to vector<8x896xf32>
    %34 = arith.extui %31 : vector<8x896xi1> to vector<8x896xi32>
    %35 = arith.sitofp %34 : vector<8x896xi32> to vector<8x896xf32>
    %cst_11 = arith.constant 0.000000e+00 : f32
    %36 = vector.broadcast %cst_11 : f32 to vector<8x896xf32>
    %37 = arith.maximumf %26, %36 : vector<8x896xf32>
    %38 = arith.mulf %26, %27 : vector<8x896xf32>
    %39 = arith.subf %37, %38 : vector<8x896xf32>
    %40 = math.absf %26 : vector<8x896xf32>
    %cst_12 = arith.constant 0.000000e+00 : f32
    %41 = vector.broadcast %cst_12 : f32 to vector<8x896xf32>
    %42 = arith.subf %41, %40 : vector<8x896xf32>
    %43 = math.exp %42 : vector<8x896xf32>
    %44 = math.log1p %43 : vector<8x896xf32>
    %45 = arith.addf %39, %44 : vector<8x896xf32>
    %cst_13 = arith.constant 0.000000e+00 : f32
    %46 = vector.broadcast %cst_13 : f32 to vector<8x896xf32>
    %47 = arith.cmpf oge, %26, %46 : vector<8x896xf32>
    %48 = arith.extui %47 : vector<8x896xi1> to vector<8x896xi32>
    %49 = arith.sitofp %48 : vector<8x896xi32> to vector<8x896xf32>
    %cst_14 = arith.constant 0.000000e+00 : f32
    %50 = vector.broadcast %cst_14 : f32 to vector<8x1xf32>
    %51 = vector.extract_strided_slice %33 {offsets = [0, 0], sizes = [8, 895], strides = [1, 1]} : vector<8x896xf32> to vector<8x895xf32>
    %52 = tpu.concatenate %50, %51 in 1 : vector<8x1xf32>, vector<8x895xf32> -> vector<8x896xf32>
    %53 = arith.addf %33, %52 : vector<8x896xf32>
    %cst_15 = arith.constant 0.000000e+00 : f32
    %54 = vector.broadcast %cst_15 : f32 to vector<8x2xf32>
    %55 = vector.extract_strided_slice %53 {offsets = [0, 0], sizes = [8, 894], strides = [1, 1]} : vector<8x896xf32> to vector<8x894xf32>
    %56 = tpu.concatenate %54, %55 in 1 : vector<8x2xf32>, vector<8x894xf32> -> vector<8x896xf32>
    %57 = arith.addf %53, %56 : vector<8x896xf32>
    %cst_16 = arith.constant 0.000000e+00 : f32
    %58 = vector.broadcast %cst_16 : f32 to vector<8x4xf32>
    %59 = vector.extract_strided_slice %57 {offsets = [0, 0], sizes = [8, 892], strides = [1, 1]} : vector<8x896xf32> to vector<8x892xf32>
    %60 = tpu.concatenate %58, %59 in 1 : vector<8x4xf32>, vector<8x892xf32> -> vector<8x896xf32>
    %61 = arith.addf %57, %60 : vector<8x896xf32>
    %62 = arith.subf %26, %27 : vector<8x896xf32>
    %63 = math.absf %62 : vector<8x896xf32>
    %cst_17 = arith.constant 1.000000e+00 : f32
    %64 = vector.broadcast %cst_17 : f32 to vector<8x896xf32>
    %65 = arith.cmpf olt, %63, %64 : vector<8x896xf32>
    %cst_18 = arith.constant 5.000000e-01 : f32
    %66 = vector.broadcast %cst_18 : f32 to vector<8x896xf32>
    %67 = arith.mulf %66, %62 : vector<8x896xf32>
    %68 = arith.mulf %67, %62 : vector<8x896xf32>
    %cst_19 = arith.constant 5.000000e-01 : f32
    %69 = vector.broadcast %cst_19 : f32 to vector<8x896xf32>
    %70 = arith.subf %63, %69 : vector<8x896xf32>
    %71 = arith.select %65, %68, %70 : vector<8x896xi1>, vector<8x896xf32>
    %72 = arith.mulf %71, %61 : vector<8x896xf32>
    %cst_20 = arith.constant 0.000000e+00 : f32
    %73 = vector.broadcast %cst_20 : f32 to vector<8x896xf32>
    %74 = arith.select %29, %45, %73 : vector<8x896xi1>, vector<8x896xf32>
    %75 = arith.addf %25, %74 : vector<8x896xf32>
    %76 = arith.addf %25, %33 : vector<8x896xf32>
    %77 = arith.mulf %33, %49 : vector<8x896xf32>
    %78 = arith.addf %25, %77 : vector<8x896xf32>
    %79 = arith.subf %45, %26 : vector<8x896xf32>
    %cst_21 = arith.constant 0.000000e+00 : f32
    %80 = vector.broadcast %cst_21 : f32 to vector<8x896xf32>
    %81 = arith.select %31, %79, %80 : vector<8x896xi1>, vector<8x896xf32>
    %82 = arith.addf %25, %81 : vector<8x896xf32>
    %83 = arith.addf %25, %35 : vector<8x896xf32>
    %84 = arith.mulf %35, %49 : vector<8x896xf32>
    %85 = arith.addf %25, %84 : vector<8x896xf32>
    %86 = arith.addf %25, %72 : vector<8x896xf32>
    %cst_22 = arith.constant 0.000000e+00 : f32
    %87 = vector.broadcast %cst_22 : f32 to vector<8x1xf32>
    %88 = vector.extract_strided_slice %76 {offsets = [0, 0], sizes = [8, 895], strides = [1, 1]} : vector<8x896xf32> to vector<8x895xf32>
    %89 = tpu.concatenate %87, %88 in 1 : vector<8x1xf32>, vector<8x895xf32> -> vector<8x896xf32>
    %90 = arith.addf %75, %89 : vector<8x896xf32>
    %cst_23 = arith.constant 0.000000e+00 : f32
    %91 = vector.broadcast %cst_23 : f32 to vector<8x2xf32>
    %92 = vector.extract_strided_slice %78 {offsets = [0, 0], sizes = [8, 894], strides = [1, 1]} : vector<8x896xf32> to vector<8x894xf32>
    %93 = tpu.concatenate %91, %92 in 1 : vector<8x2xf32>, vector<8x894xf32> -> vector<8x896xf32>
    %94 = arith.addf %90, %93 : vector<8x896xf32>
    %cst_24 = arith.constant 0.000000e+00 : f32
    %95 = vector.broadcast %cst_24 : f32 to vector<8x3xf32>
    %96 = vector.extract_strided_slice %82 {offsets = [0, 0], sizes = [8, 893], strides = [1, 1]} : vector<8x896xf32> to vector<8x893xf32>
    %97 = tpu.concatenate %95, %96 in 1 : vector<8x3xf32>, vector<8x893xf32> -> vector<8x896xf32>
    %98 = arith.addf %94, %97 : vector<8x896xf32>
    %cst_25 = arith.constant 0.000000e+00 : f32
    %99 = vector.broadcast %cst_25 : f32 to vector<8x4xf32>
    %100 = vector.extract_strided_slice %83 {offsets = [0, 0], sizes = [8, 892], strides = [1, 1]} : vector<8x896xf32> to vector<8x892xf32>
    %101 = tpu.concatenate %99, %100 in 1 : vector<8x4xf32>, vector<8x892xf32> -> vector<8x896xf32>
    %102 = arith.addf %98, %101 : vector<8x896xf32>
    %cst_26 = arith.constant 0.000000e+00 : f32
    %103 = vector.broadcast %cst_26 : f32 to vector<8x5xf32>
    %104 = vector.extract_strided_slice %85 {offsets = [0, 0], sizes = [8, 891], strides = [1, 1]} : vector<8x896xf32> to vector<8x891xf32>
    %105 = tpu.concatenate %103, %104 in 1 : vector<8x5xf32>, vector<8x891xf32> -> vector<8x896xf32>
    %106 = arith.addf %102, %105 : vector<8x896xf32>
    %c0_i32_27 = arith.constant 0 : i32
    %107 = arith.cmpi eq, %arg1, %c0_i32_27 : i32
    %108 = arith.extui %107 : i1 to i32
    %c0_i32_28 = arith.constant 0 : i32
    %109 = arith.cmpi ne, %108, %c0_i32_28 : i32
    scf.if %109 {
      %cst_41 = arith.constant 0.000000e+00 : f32
      %118 = vector.broadcast %cst_41 : f32 to vector<1x8x896xf32>
      %c0_42 = arith.constant 0 : index
      %c0_43 = arith.constant 0 : index
      %c0_44 = arith.constant 0 : index
      %119 = vector.load %arg4[%c0_42, %c0_43, %c0_44] : memref<1x8x896xf32, #tpu.memory_space<vmem>>, vector<1x8x896xf32>
      tpu.vector_store %arg4[%c0_42, %c0_43, %c0_44], %118 {strides = array<i32>} : memref<1x8x896xf32, #tpu.memory_space<vmem>>, vector<1x8x896xf32>,
      %cst_45 = arith.constant 0.000000e+00 : f32
      %120 = vector.broadcast %cst_45 : f32 to vector<1x8x896xf32>
      %c0_46 = arith.constant 0 : index
      %c0_47 = arith.constant 0 : index
      %c0_48 = arith.constant 0 : index
      %121 = vector.load %arg5[%c0_46, %c0_47, %c0_48] : memref<1x8x896xf32, #tpu.memory_space<vmem>>, vector<1x8x896xf32>
      tpu.vector_store %arg5[%c0_46, %c0_47, %c0_48], %120 {strides = array<i32>} : memref<1x8x896xf32, #tpu.memory_space<vmem>>, vector<1x8x896xf32>,
    } else {
    }
    %c0_29 = arith.constant 0 : index
    %c0_30 = arith.constant 0 : index
    %c0_31 = arith.constant 0 : index
    %110 = vector.load %arg4[%c0_29, %c0_30, %c0_31] : memref<1x8x896xf32, #tpu.memory_space<vmem>>, vector<1x8x896xf32>
    %111 = vector.shape_cast %106 : vector<8x896xf32> to vector<1x8x896xf32>
    %112 = arith.addf %110, %111 : vector<1x8x896xf32>
    %c0_32 = arith.constant 0 : index
    %c0_33 = arith.constant 0 : index
    %c0_34 = arith.constant 0 : index
    %113 = vector.load %arg4[%c0_32, %c0_33, %c0_34] : memref<1x8x896xf32, #tpu.memory_space<vmem>>, vector<1x8x896xf32>
    tpu.vector_store %arg4[%c0_32, %c0_33, %c0_34], %112 {strides = array<i32>} : memref<1x8x896xf32, #tpu.memory_space<vmem>>, vector<1x8x896xf32>,
    %c0_35 = arith.constant 0 : index
    %c0_36 = arith.constant 0 : index
    %c0_37 = arith.constant 0 : index
    %114 = vector.load %arg5[%c0_35, %c0_36, %c0_37] : memref<1x8x896xf32, #tpu.memory_space<vmem>>, vector<1x8x896xf32>
    %115 = vector.shape_cast %86 : vector<8x896xf32> to vector<1x8x896xf32>
    %116 = arith.addf %114, %115 : vector<1x8x896xf32>
    %c0_38 = arith.constant 0 : index
    %c0_39 = arith.constant 0 : index
    %c0_40 = arith.constant 0 : index
    %117 = vector.load %arg5[%c0_38, %c0_39, %c0_40] : memref<1x8x896xf32, #tpu.memory_space<vmem>>, vector<1x8x896xf32>
    tpu.vector_store %arg5[%c0_38, %c0_39, %c0_40], %116 {strides = array<i32>} : memref<1x8x896xf32, #tpu.memory_space<vmem>>, vector<1x8x896xf32>,
    return
  }
  func.func @transform_0(%arg0: i32, %arg1: i32) -> (i32, i32) {
    %c1_i32 = arith.constant 1 : i32
    %0 = arith.muli %arg0, %c1_i32 : i32
    %1 = arith.addi %0, %arg1 : i32
    %c0_i32 = arith.constant 0 : i32
    %c0_i32_0 = arith.constant 0 : i32
    return %1, %c0_i32 : i32, i32
  }
  func.func @transform_1(%arg0: i32, %arg1: i32) -> (i32, i32) {
    %c1_i32 = arith.constant 1 : i32
    %0 = arith.muli %arg0, %c1_i32 : i32
    %1 = arith.addi %0, %arg1 : i32
    %c0_i32 = arith.constant 0 : i32
    %c0_i32_0 = arith.constant 0 : i32
    return %1, %c0_i32 : i32, i32
  }
  func.func @transform_2(%arg0: i32, %arg1: i32) -> (i32, i32, i32) {
    %c0_i32 = arith.constant 0 : i32
    %c0_i32_0 = arith.constant 0 : i32
    %c0_i32_1 = arith.constant 0 : i32
    return %arg0, %c0_i32, %c0_i32_0 : i32, i32, i32
  }
  func.func @transform_3(%arg0: i32, %arg1: i32) -> (i32, i32, i32) {
    %c0_i32 = arith.constant 0 : i32
    %c0_i32_0 = arith.constant 0 : i32
    %c0_i32_1 = arith.constant 0 : i32
    return %arg0, %c0_i32, %c0_i32_0 : i32, i32, i32
  }
}

</mosaic_0001>

<llo_original>
// kernel: tpu_custom_call.1
$region0: #{tpu_custom_call.1}
  #allocation0 [shape = 'u32[]', space=smem, size = 0x4, offset = 0x4, fixed_abs, tag = 'smem constant byte address 0x4 - core index']
  #allocation1 [shape = 'u32[72,128]{1,0:T(1,128)}', space=vmem, size = 0x9000, scoped, tag = 'internal scratch']
  %s0 = inlined_call_operand.hbm [shape: f32[8,128], index: 0, kind: input, shape index: {}]
  %s1 = inlined_call_operand.hbm [shape: f32[8,128], index: 1, kind: output, shape index: {}]
  %s2 = sld [smem:[#allocation0]]
  $region18: #{tpu_custom_call.1} parent=0
    _
  %s4 = ssub.s32 1, %s2
  %s5 = scalar_select 0, %s4, %s2
  $region1: #{tpu_custom_call.1} parent=0
    #allocation2 [shape = 'u8[4096]{0}', space=vmem, size = 0x1000, scoped, tag = 'input window, operand 0, single buffered']
    #allocation3 [shape = 's32[1]{0}', space=sflag, size = 0x4, scoped, tag = 'scoped memory for tpu_custom_call.1']
    #allocation4 [shape = 's32[1]{0}', space=sflag, size = 0x4, scoped, tag = 'scoped memory for tpu_custom_call.1']
    #allocation5 [shape = 'u8[4096]{0}', space=vmem, size = 0x1000, scoped, tag = 'output window, operand 0, single buffered']
    %6 = vsyncpa [#allocation3], 0
    %7 = vsyncpa [#allocation4], 0
    // Predicated region
    $region2: #{tpu_custom_call.1} parent=1 // pred_check
      _
    $region3: #{tpu_custom_call.1} parent=1 // pred_check_branch
      %9 = sbr.rel (0) target = $region5
    $region4: #{tpu_custom_call.1} parent=1 // pred_region
      %11 = vsyncadd [#allocation3], 0
      %s13 = sshll.u32 %s0, 4
      %s14 = int_to_ptr.hbm [resolvable:$true] %s13
      %s15 = sshll.u32 [#allocation2], 4
      %s16 = int_to_ptr.vmem [resolvable:$true] %s15
      %18 = dma.hbm_to_vmem [thread:$0]  %s14, 128, %s16, [#allocation3]
    $region5: #{tpu_custom_call.1} parent=1 // pred_fallthru
      _
    // Predicated region
    $region6: #{tpu_custom_call.1} parent=1 // pred_check
      _
    $region7: #{tpu_custom_call.1} parent=1 // pred_check_branch
      %20 = sbr.rel (0) target = $region9
    $region8: #{tpu_custom_call.1} parent=1 // pred_region
      %22 = dma.done [#allocation3], 128
    $region9: #{tpu_custom_call.1} parent=1 // pred_fallthru
      _
    %v23 = vld [vmem:[#allocation2] sm:$0xff]
    %24 = vrot.lane.b32.xlu0 %v23, 1
    %v25 = vpop.permute.xlu0 %24
    %26 = vst [vmem:[#allocation5] sm:$0xff] %v25
    // Predicated region
    $region10: #{tpu_custom_call.1} parent=1 // pred_check
      _
    $region11: #{tpu_custom_call.1} parent=1 // pred_check_branch
      %28 = sbr.rel (0) target = $region13
    $region12: #{tpu_custom_call.1} parent=1 // pred_region
      %30 = vsyncadd [#allocation4], 0
      %s32 = sshll.u32 [#allocation5], 4
      %s33 = int_to_ptr.vmem [resolvable:$true] %s32
      %s34 = sshll.u32 %s1, 4
      %s35 = int_to_ptr.hbm [resolvable:$true] %s34
      %37 = dma.vmem_to_hbm [thread:$0]  %s33, 128, %s35, [#allocation4]
    $region13: #{tpu_custom_call.1} parent=1 // pred_fallthru
      _
    // Predicated region
    $region14: #{tpu_custom_call.1} parent=1 // pred_check
      _
    $region15: #{tpu_custom_call.1} parent=1 // pred_check_branch
      %39 = sbr.rel (0) target = $region17
    $region16: #{tpu_custom_call.1} parent=1 // pred_region
      %41 = dma.done [#allocation4], 128
    $region17: #{tpu_custom_call.1} parent=1 // pred_fallthru
      _
    %42 = vsyncpa [#allocation3], 1
    %43 = vsyncpa [#allocation4], 1

// kernel: tpu_custom_call.1
$region0: #{tpu_custom_call.1}
  #allocation0 [shape = 'u32[]', space=smem, size = 0x4, offset = 0x4, fixed_abs, tag = 'smem constant byte address 0x4 - core index']
  #allocation1 [shape = 'u32[72,128]{1,0:T(1,128)}', space=vmem, size = 0x9000, scoped, tag = 'internal scratch']
  %s0 = inlined_call_operand.hbm [shape: f32[8,896], index: 0, kind: input, shape index: {}]
  %s1 = inlined_call_operand.hbm [shape: f32[8,896], index: 1, kind: input, shape index: {}]
  %s2 = inlined_call_operand.hbm [shape: f32[1,8,896], index: 2, kind: output, shape index: {0}]
  %s3 = inlined_call_operand.hbm [shape: f32[1,8,896], index: 3, kind: output, shape index: {1}]
  %4 = xla_tuple %s2, %s3
  %s5 = sld [smem:[#allocation0]]
  $region38: #{tpu_custom_call.1} parent=0
    _
  %s7 = ssub.s32 1, %s5
  %s8 = scalar_select 0, %s7, %s5
  $region1: #{tpu_custom_call.1} parent=0
    #allocation2 [shape = 'u8[28672]{0}', space=vmem, size = 0x7000, scoped, tag = 'input window, operand 0, single buffered']
    #allocation3 [shape = 's32[1]{0}', space=sflag, size = 0x4, scoped, tag = 'scoped memory for tpu_custom_call.1']
    #allocation4 [shape = 's32[1]{0}', space=sflag, size = 0x4, scoped, tag = 'scoped memory for tpu_custom_call.1']
    #allocation5 [shape = 'u8[28672]{0}', space=vmem, size = 0x7000, scoped, tag = 'input window, operand 1, single buffered']
    #allocation6 [shape = 's32[1]{0}', space=sflag, size = 0x4, scoped, tag = 'scoped memory for tpu_custom_call.1']
    #allocation7 [shape = 'u8[28672]{0}', space=vmem, size = 0x7000, scoped, tag = 'output window, operand 0, single buffered']
    #allocation8 [shape = 'u8[28672]{0}', space=vmem, size = 0x7000, scoped, tag = 'output window, operand 1, single buffered']
    #allocation9 [shape = 's32[1]{0}', space=sflag, size = 0x4, scoped, tag = 'scoped memory for tpu_custom_call.1']
    %9 = vsyncpa [#allocation3], 0
    %10 = vsyncpa [#allocation6], 0
    %11 = vsyncpa [#allocation4], 0
    %12 = vsyncpa [#allocation9], 0
    // Predicated region
    $region2: #{tpu_custom_call.1} parent=1 // pred_check
      _
    $region3: #{tpu_custom_call.1} parent=1 // pred_check_branch
      %14 = sbr.rel (0) target = $region5
    $region4: #{tpu_custom_call.1} parent=1 // pred_region
      %s15 = sadd.s32 0, 0
      %17 = vsyncadd [#allocation3], 0
      %s18 = smul.addr %s15, 7
      %s19 = smul.addr %s18, 8
      %s20 = scalar_lea.hbm %s0, %s19
      %s22 = sshll.u32 %s20, 4
      %s23 = int_to_ptr.hbm [resolvable:$true] %s22
      %s24 = sshll.u32 [#allocation2], 4
      %s25 = int_to_ptr.vmem [resolvable:$true] %s24
      %27 = dma.hbm_to_vmem [thread:$0]  %s23, 896, %s25, [#allocation3]
    $region5: #{tpu_custom_call.1} parent=1 // pred_fallthru
      _
    // Predicated region
    $region6: #{tpu_custom_call.1} parent=1 // pred_check
      _
    $region7: #{tpu_custom_call.1} parent=1 // pred_check_branch
      %29 = sbr.rel (0) target = $region9
    $region8: #{tpu_custom_call.1} parent=1 // pred_region
      %s30 = sadd.s32 0, 0
      %32 = vsyncadd [#allocation6], 0
      %s33 = smul.addr %s30, 7
      %s34 = smul.addr %s33, 8
      %s35 = scalar_lea.hbm %s1, %s34
      %s37 = sshll.u32 %s35, 4
      %s38 = int_to_ptr.hbm [resolvable:$true] %s37
      %s39 = sshll.u32 [#allocation5], 4
      %s40 = int_to_ptr.vmem [resolvable:$true] %s39
      %42 = dma.hbm_to_vmem [thread:$0]  %s38, 896, %s40, [#allocation6]
    $region9: #{tpu_custom_call.1} parent=1 // pred_fallthru
      _
    // Predicated region
    $region10: #{tpu_custom_call.1} parent=1 // pred_check
      _
    $region11: #{tpu_custom_call.1} parent=1 // pred_check_branch
      %44 = sbr.rel (0) target = $region13
    $region12: #{tpu_custom_call.1} parent=1 // pred_region
      %46 = dma.done [#allocation3], 896
    $region13: #{tpu_custom_call.1} parent=1 // pred_fallthru
      _
    // Predicated region
    $region14: #{tpu_custom_call.1} parent=1 // pred_check
      _
    $region15: #{tpu_custom_call.1} parent=1 // pred_check_branch
      %48 = sbr.rel (0) target = $region17
    $region16: #{tpu_custom_call.1} parent=1 // pred_region
      %50 = dma.done [#allocation6], 896
    $region17: #{tpu_custom_call.1} parent=1 // pred_fallthru
      _
    %s51 = sadd.s32 0, 0
    %s52 = sadd.s32 0, 0
    %v53 = vlaneseq
    %v54 = vand.u32 %v53, 127
    %v55 = vadd.s32 %v54, 128
    %v56 = vadd.s32 %v54, 256
    %v57 = vadd.s32 %v54, 384
    %v58 = vadd.s32 %v54, 512
    %v59 = vadd.s32 %v54, 640
    %v60 = vadd.s32 %v54, 768
    %vm61 = vcmp.lt.s32.totalorder %v54, 0
    %v62 = vsub.s32 0, %v54
    %v63 = vsel %vm61, %v62, %v54
    %v64 = vand.u32 %v63, 65535
    %v65 = vshrl.u32 %v63, 16
    %v67 = vmul.u32 %v64, 9362
    %v68 = vmul.u32 %v64, 37449
    %v69 = vmul.u32 %v65, 9362
    %v70 = vmul.u32 %v65, 37449
    %v71 = vshll.u32 %v68, 16
    %v72 = vshrl.u32 %v68, 16
    %v73 = vshll.u32 %v69, 16
    %v74 = vshrl.u32 %v69, 16
    %vm75 = vc.u32 %v67, %v71
    %v76 = vsel %vm75, 1, 0
    %v77 = vadd.s32 %v67, %v71
    %v78 = vadd.s32 %v70, %v76
    %vm79 = vc.u32 %v77, %v73
    %v80 = vsel %vm79, 1, 0
    %v81 = vadd.s32 %v77, %v73
    %v82 = vadd.s32 %v78, %v80
    %v83 = vadd.s32 %v82, %v72
    %v84 = vadd.s32 %v83, %v74
    %vm85 = vc.u32 %v81, 2454267026
    %v86 = vsel %vm85, 1, 0
    %v87 = vadd.s32 %v84, %v86
    %v88 = vshrl.u32 %v87, 2
    %v89 = vmul.u32 %v88, 7
    %v90 = vsub.s32 %v63, %v89
    %v91 = vsub.s32 0, %v90
    %v92 = vsel %vm61, %v91, %v90
    %vm93 = vcmp.lt.s32.totalorder %v55, 0
    %v94 = vsub.s32 0, %v55
    %v95 = vsel %vm93, %v94, %v55
    %v96 = vand.u32 %v95, 65535
    %v97 = vshrl.u32 %v95, 16
    %v99 = vmul.u32 %v96, 9362
    %v100 = vmul.u32 %v96, 37449
    %v101 = vmul.u32 %v97, 9362
    %v102 = vmul.u32 %v97, 37449
    %v103 = vshll.u32 %v100, 16
    %v104 = vshrl.u32 %v100, 16
    %v105 = vshll.u32 %v101, 16
    %v106 = vshrl.u32 %v101, 16
    %vm107 = vc.u32 %v99, %v103
    %v108 = vsel %vm107, 1, 0
    %v109 = vadd.s32 %v99, %v103
    %v110 = vadd.s32 %v102, %v108
    %vm111 = vc.u32 %v109, %v105
    %v112 = vsel %vm111, 1, 0
    %v113 = vadd.s32 %v109, %v105
    %v114 = vadd.s32 %v110, %v112
    %v115 = vadd.s32 %v114, %v104
    %v116 = vadd.s32 %v115, %v106
    %vm117 = vc.u32 %v113, 2454267026
    %v118 = vsel %vm117, 1, 0
    %v119 = vadd.s32 %v116, %v118
    %v120 = vshrl.u32 %v119, 2
    %v121 = vmul.u32 %v120, 7
    %v122 = vsub.s32 %v95, %v121
    %v123 = vsub.s32 0, %v122
    %v124 = vsel %vm93, %v123, %v122
    %vm125 = vcmp.lt.s32.totalorder %v56, 0
    %v126 = vsub.s32 0, %v56
    %v127 = vsel %vm125, %v126, %v56
    %v128 = vand.u32 %v127, 65535
    %v129 = vshrl.u32 %v127, 16
    %v131 = vmul.u32 %v128, 9362
    %v132 = vmul.u32 %v128, 37449
    %v133 = vmul.u32 %v129, 9362
    %v134 = vmul.u32 %v129, 37449
    %v135 = vshll.u32 %v132, 16
    %v136 = vshrl.u32 %v132, 16
    %v137 = vshll.u32 %v133, 16
    %v138 = vshrl.u32 %v133, 16
    %vm139 = vc.u32 %v131, %v135
    %v140 = vsel %vm139, 1, 0
    %v141 = vadd.s32 %v131, %v135
    %v142 = vadd.s32 %v134, %v140
    %vm143 = vc.u32 %v141, %v137
    %v144 = vsel %vm143, 1, 0
    %v145 = vadd.s32 %v141, %v137
    %v146 = vadd.s32 %v142, %v144
    %v147 = vadd.s32 %v146, %v136
    %v148 = vadd.s32 %v147, %v138
    %vm149 = vc.u32 %v145, 2454267026
    %v150 = vsel %vm149, 1, 0
    %v151 = vadd.s32 %v148, %v150
    %v152 = vshrl.u32 %v151, 2
    %v153 = vmul.u32 %v152, 7
    %v154 = vsub.s32 %v127, %v153
    %v155 = vsub.s32 0, %v154
    %v156 = vsel %vm125, %v155, %v154
    %vm157 = vcmp.lt.s32.totalorder %v57, 0
    %v158 = vsub.s32 0, %v57
    %v159 = vsel %vm157, %v158, %v57
    %v160 = vand.u32 %v159, 65535
    %v161 = vshrl.u32 %v159, 16
    %v163 = vmul.u32 %v160, 9362
    %v164 = vmul.u32 %v160, 37449
    %v165 = vmul.u32 %v161, 9362
    %v166 = vmul.u32 %v161, 37449
    %v167 = vshll.u32 %v164, 16
    %v168 = vshrl.u32 %v164, 16
    %v169 = vshll.u32 %v165, 16
    %v170 = vshrl.u32 %v165, 16
    %vm171 = vc.u32 %v163, %v167
    %v172 = vsel %vm171, 1, 0
    %v173 = vadd.s32 %v163, %v167
    %v174 = vadd.s32 %v166, %v172
    %vm175 = vc.u32 %v173, %v169
    %v176 = vsel %vm175, 1, 0
    %v177 = vadd.s32 %v173, %v169
    %v178 = vadd.s32 %v174, %v176
    %v179 = vadd.s32 %v178, %v168
    %v180 = vadd.s32 %v179, %v170
    %vm181 = vc.u32 %v177, 2454267026
    %v182 = vsel %vm181, 1, 0
    %v183 = vadd.s32 %v180, %v182
    %v184 = vshrl.u32 %v183, 2
    %v185 = vmul.u32 %v184, 7
    %v186 = vsub.s32 %v159, %v185
    %v187 = vsub.s32 0, %v186
    %v188 = vsel %vm157, %v187, %v186
    %vm189 = vcmp.lt.s32.totalorder %v58, 0
    %v190 = vsub.s32 0, %v58
    %v191 = vsel %vm189, %v190, %v58
    %v192 = vand.u32 %v191, 65535
    %v193 = vshrl.u32 %v191, 16
    %v195 = vmul.u32 %v192, 9362
    %v196 = vmul.u32 %v192, 37449
    %v197 = vmul.u32 %v193, 9362
    %v198 = vmul.u32 %v193, 37449
    %v199 = vshll.u32 %v196, 16
    %v200 = vshrl.u32 %v196, 16
    %v201 = vshll.u32 %v197, 16
    %v202 = vshrl.u32 %v197, 16
    %vm203 = vc.u32 %v195, %v199
    %v204 = vsel %vm203, 1, 0
    %v205 = vadd.s32 %v195, %v199
    %v206 = vadd.s32 %v198, %v204
    %vm207 = vc.u32 %v205, %v201
    %v208 = vsel %vm207, 1, 0
    %v209 = vadd.s32 %v205, %v201
    %v210 = vadd.s32 %v206, %v208
    %v211 = vadd.s32 %v210, %v200
    %v212 = vadd.s32 %v211, %v202
    %vm213 = vc.u32 %v209, 2454267026
    %v214 = vsel %vm213, 1, 0
    %v215 = vadd.s32 %v212, %v214
    %v216 = vshrl.u32 %v215, 2
    %v217 = vmul.u32 %v216, 7
    %v218 = vsub.s32 %v191, %v217
    %v219 = vsub.s32 0, %v218
    %v220 = vsel %vm189, %v219, %v218
    %vm221 = vcmp.lt.s32.totalorder %v59, 0
    %v222 = vsub.s32 0, %v59
    %v223 = vsel %vm221, %v222, %v59
    %v224 = vand.u32 %v223, 65535
    %v225 = vshrl.u32 %v223, 16
    %v227 = vmul.u32 %v224, 9362
    %v228 = vmul.u32 %v224, 37449
    %v229 = vmul.u32 %v225, 9362
    %v230 = vmul.u32 %v225, 37449
    %v231 = vshll.u32 %v228, 16
    %v232 = vshrl.u32 %v228, 16
    %v233 = vshll.u32 %v229, 16
    %v234 = vshrl.u32 %v229, 16
    %vm235 = vc.u32 %v227, %v231
    %v236 = vsel %vm235, 1, 0
    %v237 = vadd.s32 %v227, %v231
    %v238 = vadd.s32 %v230, %v236
    %vm239 = vc.u32 %v237, %v233
    %v240 = vsel %vm239, 1, 0
    %v241 = vadd.s32 %v237, %v233
    %v242 = vadd.s32 %v238, %v240
    %v243 = vadd.s32 %v242, %v232
    %v244 = vadd.s32 %v243, %v234
    %vm245 = vc.u32 %v241, 2454267026
    %v246 = vsel %vm245, 1, 0
    %v247 = vadd.s32 %v244, %v246
    %v248 = vshrl.u32 %v247, 2
    %v249 = vmul.u32 %v248, 7
    %v250 = vsub.s32 %v223, %v249
    %v251 = vsub.s32 0, %v250
    %v252 = vsel %vm221, %v251, %v250
    %vm253 = vcmp.lt.s32.totalorder %v60, 0
    %v254 = vsub.s32 0, %v60
    %v255 = vsel %vm253, %v254, %v60
    %v256 = vand.u32 %v255, 65535
    %v257 = vshrl.u32 %v255, 16
    %v259 = vmul.u32 %v256, 9362
    %v260 = vmul.u32 %v256, 37449
    %v261 = vmul.u32 %v257, 9362
    %v262 = vmul.u32 %v257, 37449
    %v263 = vshll.u32 %v260, 16
    %v264 = vshrl.u32 %v260, 16
    %v265 = vshll.u32 %v261, 16
    %v266 = vshrl.u32 %v261, 16
    %vm267 = vc.u32 %v259, %v263
    %v268 = vsel %vm267, 1, 0
    %v269 = vadd.s32 %v259, %v263
    %v270 = vadd.s32 %v262, %v268
    %vm271 = vc.u32 %v269, %v265
    %v272 = vsel %vm271, 1, 0
    %v273 = vadd.s32 %v269, %v265
    %v274 = vadd.s32 %v270, %v272
    %v275 = vadd.s32 %v274, %v264
    %v276 = vadd.s32 %v275, %v266
    %vm277 = vc.u32 %v273, 2454267026
    %v278 = vsel %vm277, 1, 0
    %v279 = vadd.s32 %v276, %v278
    %v280 = vshrl.u32 %v279, 2
    %v281 = vmul.u32 %v280, 7
    %v282 = vsub.s32 %v255, %v281
    %v283 = vsub.s32 0, %v282
    %v284 = vsel %vm253, %v283, %v282
    %vm285 = vcmp.ne.s32.totalorder %v92, 0
    %vm286 = vcmp.ne.s32.totalorder %v124, 0
    %vm287 = vcmp.ne.s32.totalorder %v156, 0
    %vm288 = vcmp.ne.s32.totalorder %v188, 0
    %vm289 = vcmp.ne.s32.totalorder %v220, 0
    %vm290 = vcmp.ne.s32.totalorder %v252, 0
    %vm291 = vcmp.ne.s32.totalorder %v284, 0
    %vm292 = vcmp.lt.s32.totalorder %v92, 0
    %vm293 = vcmp.lt.s32.totalorder %v124, 0
    %vm294 = vcmp.lt.s32.totalorder %v156, 0
    %vm295 = vcmp.lt.s32.totalorder %v188, 0
    %vm296 = vcmp.lt.s32.totalorder %v220, 0
    %vm297 = vcmp.lt.s32.totalorder %v252, 0
    %vm298 = vcmp.lt.s32.totalorder %v284, 0
    %vm299 = vmand %vm292, %vm285
    %vm300 = vmand %vm293, %vm286
    %vm301 = vmand %vm294, %vm287
    %vm302 = vmand %vm295, %vm288
    %vm303 = vmand %vm296, %vm289
    %vm304 = vmand %vm297, %vm290
    %vm305 = vmand %vm298, %vm291
    %v306 = vadd.s32 %v92, 7
    %v307 = vadd.s32 %v124, 7
    %v308 = vadd.s32 %v156, 7
    %v309 = vadd.s32 %v188, 7
    %v310 = vadd.s32 %v220, 7
    %v311 = vadd.s32 %v252, 7
    %v312 = vadd.s32 %v284, 7
    %v313 = vsel %vm299, %v306, %v92
    %v314 = vsel %vm300, %v307, %v124
    %v315 = vsel %vm301, %v308, %v156
    %v316 = vsel %vm302, %v309, %v188
    %v317 = vsel %vm303, %v310, %v220
    %v318 = vsel %vm304, %v311, %v252
    %v319 = vsel %vm305, %v312, %v284
    %vm320 = vcmp.eq.s32.totalorder %v313, 0
    %vm321 = vcmp.eq.s32.totalorder %v314, 0
    %vm322 = vcmp.eq.s32.totalorder %v315, 0
    %vm323 = vcmp.eq.s32.totalorder %v316, 0
    %vm324 = vcmp.eq.s32.totalorder %v317, 0
    %vm325 = vcmp.eq.s32.totalorder %v318, 0
    %vm326 = vcmp.eq.s32.totalorder %v319, 0
    %v327 = vsel %vm320, 0.5, inf
    %v328 = vsel %vm321, 0.5, inf
    %v329 = vsel %vm322, 0.5, inf
    %v330 = vsel %vm323, 0.5, inf
    %v331 = vsel %vm324, 0.5, inf
    %v332 = vsel %vm325, 0.5, inf
    %v333 = vsel %vm326, 0.5, inf
    %v334 = vsel %vm320, -0.5, -inf
    %v335 = vsel %vm321, -0.5, -inf
    %v336 = vsel %vm322, -0.5, -inf
    %v337 = vsel %vm323, -0.5, -inf
    %v338 = vsel %vm324, -0.5, -inf
    %v339 = vsel %vm325, -0.5, -inf
    %v340 = vsel %vm326, -0.5, -inf
    %v341 = vld [vmem:[#allocation2] sm:$0xff]
    %v342 = vld [vmem:[#allocation2 + $0x8] sm:$0xff]
    %v343 = vld [vmem:[#allocation2 + $0x10] sm:$0xff]
    %v344 = vld [vmem:[#allocation2 + $0x18] sm:$0xff]
    %v345 = vld [vmem:[#allocation2 + $0x20] sm:$0xff]
    %v346 = vld [vmem:[#allocation2 + $0x28] sm:$0xff]
    %v347 = vld [vmem:[#allocation2 + $0x30] sm:$0xff]
    %v348 = vld [vmem:[#allocation5] sm:$0xff]
    %v349 = vld [vmem:[#allocation5 + $0x8] sm:$0xff]
    %v350 = vld [vmem:[#allocation5 + $0x10] sm:$0xff]
    %v351 = vld [vmem:[#allocation5 + $0x18] sm:$0xff]
    %v352 = vld [vmem:[#allocation5 + $0x20] sm:$0xff]
    %v353 = vld [vmem:[#allocation5 + $0x28] sm:$0xff]
    %v354 = vld [vmem:[#allocation5 + $0x30] sm:$0xff]
    %vm355 = vcmp.gt.f32.partialorder %v348, %v327
    %vm356 = vcmp.gt.f32.partialorder %v349, %v328
    %vm357 = vcmp.gt.f32.partialorder %v350, %v329
    %vm358 = vcmp.gt.f32.partialorder %v351, %v330
    %vm359 = vcmp.gt.f32.partialorder %v352, %v331
    %vm360 = vcmp.gt.f32.partialorder %v353, %v332
    %vm361 = vcmp.gt.f32.partialorder %v354, %v333
    %vm362 = vcmp.lt.f32.partialorder %v348, %v334
    %vm363 = vcmp.lt.f32.partialorder %v349, %v335
    %vm364 = vcmp.lt.f32.partialorder %v350, %v336
    %vm365 = vcmp.lt.f32.partialorder %v351, %v337
    %vm366 = vcmp.lt.f32.partialorder %v352, %v338
    %vm367 = vcmp.lt.f32.partialorder %v353, %v339
    %vm368 = vcmp.lt.f32.partialorder %v354, %v340
    %v369 = vsel %vm355, 1, 0
    %v370 = vsel %vm356, 1, 0
    %v371 = vsel %vm357, 1, 0
    %v372 = vsel %vm358, 1, 0
    %v373 = vsel %vm359, 1, 0
    %v374 = vsel %vm360, 1, 0
    %v375 = vsel %vm361, 1, 0
    %v376 = vcvt.s32.f32 %v369
    %v377 = vcvt.s32.f32 %v370
    %v378 = vcvt.s32.f32 %v371
    %v379 = vcvt.s32.f32 %v372
    %v380 = vcvt.s32.f32 %v373
    %v381 = vcvt.s32.f32 %v374
    %v382 = vcvt.s32.f32 %v375
    %v383 = vsel %vm362, 1, 0
    %v384 = vsel %vm363, 1, 0
    %v385 = vsel %vm364, 1, 0
    %v386 = vsel %vm365, 1, 0
    %v387 = vsel %vm366, 1, 0
    %v388 = vsel %vm367, 1, 0
    %v389 = vsel %vm368, 1, 0
    %v390 = vcvt.s32.f32 %v383
    %v391 = vcvt.s32.f32 %v384
    %v392 = vcvt.s32.f32 %v385
    %v393 = vcvt.s32.f32 %v386
    %v394 = vcvt.s32.f32 %v387
    %v395 = vcvt.s32.f32 %v388
    %v396 = vcvt.s32.f32 %v389
    %v397 = vmax.f32 %v341, 0.0
    %v398 = vmax.f32 %v342, 0.0
    %v399 = vmax.f32 %v343, 0.0
    %v400 = vmax.f32 %v344, 0.0
    %v401 = vmax.f32 %v345, 0.0
    %v402 = vmax.f32 %v346, 0.0
    %v403 = vmax.f32 %v347, 0.0
    %v404 = vmul.f32 %v341, %v348
    %v405 = vmul.f32 %v342, %v349
    %v406 = vmul.f32 %v343, %v350
    %v407 = vmul.f32 %v344, %v351
    %v408 = vmul.f32 %v345, %v352
    %v409 = vmul.f32 %v346, %v353
    %v410 = vmul.f32 %v347, %v354
    %v411 = vsub.f32 %v397, %v404
    %v412 = vsub.f32 %v398, %v405
    %v413 = vsub.f32 %v399, %v406
    %v414 = vsub.f32 %v400, %v407
    %v415 = vsub.f32 %v401, %v408
    %v416 = vsub.f32 %v402, %v409
    %v417 = vsub.f32 %v403, %v410
    %v418 = vand.u32 2147483647, %v341
    %v419 = vand.u32 2147483647, %v342
    %v420 = vand.u32 2147483647, %v343
    %v421 = vand.u32 2147483647, %v344
    %v422 = vand.u32 2147483647, %v345
    %v423 = vand.u32 2147483647, %v346
    %v424 = vand.u32 2147483647, %v347
    %v425 = vsub.f32 0.0, %v418
    %v426 = vsub.f32 0.0, %v419
    %v427 = vsub.f32 0.0, %v420
    %v428 = vsub.f32 0.0, %v421
    %v429 = vsub.f32 0.0, %v422
    %v430 = vsub.f32 0.0, %v423
    %v431 = vsub.f32 0.0, %v424
    %v432 = vmul.f32 %v425, 1.442695
    %v433 = vpow.pop %v432
    %v434 = vmul.f32 %v426, 1.442695
    %v435 = vpow.pop %v434
    %v436 = vmul.f32 %v427, 1.442695
    %v437 = vpow.pop %v436
    %v438 = vmul.f32 %v428, 1.442695
    %v439 = vpow.pop %v438
    %v440 = vmul.f32 %v429, 1.442695
    %v441 = vpow.pop %v440
    %v442 = vmul.f32 %v430, 1.442695
    %v443 = vpow.pop %v442
    %v444 = vmul.f32 %v431, 1.442695
    %v445 = vpow.pop %v444
    %v446 = vadd.f32 %v433, 1.0
    %v447 = vlog2.pop %v446
    %v448 = vmul.f32 %v447, 0.6931472
    %v449 = vmul.f32 -0.5, %v433
    %v450 = vadd.f32 %v449, 1.0
    %v451 = vmul.f32 %v450, %v433
    %v452 = vand.u32 2147483647, %v433
    %vm453 = vcmp.lt.f32.partialorder %v452, 0.0004427343
    %v454 = vsel %vm453, %v451, %v448
    %v455 = vadd.f32 %v435, 1.0
    %v456 = vlog2.pop %v455
    %v457 = vmul.f32 %v456, 0.6931472
    %v458 = vmul.f32 -0.5, %v435
    %v459 = vadd.f32 %v458, 1.0
    %v460 = vmul.f32 %v459, %v435
    %v461 = vand.u32 2147483647, %v435
    %vm462 = vcmp.lt.f32.partialorder %v461, 0.0004427343
    %v463 = vsel %vm462, %v460, %v457
    %v464 = vadd.f32 %v437, 1.0
    %v465 = vlog2.pop %v464
    %v466 = vmul.f32 %v465, 0.6931472
    %v467 = vmul.f32 -0.5, %v437
    %v468 = vadd.f32 %v467, 1.0
    %v469 = vmul.f32 %v468, %v437
    %v470 = vand.u32 2147483647, %v437
    %vm471 = vcmp.lt.f32.partialorder %v470, 0.0004427343
    %v472 = vsel %vm471, %v469, %v466
    %v473 = vadd.f32 %v439, 1.0
    %v474 = vlog2.pop %v473
    %v475 = vmul.f32 %v474, 0.6931472
    %v476 = vmul.f32 -0.5, %v439
    %v477 = vadd.f32 %v476, 1.0
    %v478 = vmul.f32 %v477, %v439
    %v479 = vand.u32 2147483647, %v439
    %vm480 = vcmp.lt.f32.partialorder %v479, 0.0004427343
    %v481 = vsel %vm480, %v478, %v475
    %v482 = vadd.f32 %v441, 1.0
    %v483 = vlog2.pop %v482
    %v484 = vmul.f32 %v483, 0.6931472
    %v485 = vmul.f32 -0.5, %v441
    %v486 = vadd.f32 %v485, 1.0
    %v487 = vmul.f32 %v486, %v441
    %v488 = vand.u32 2147483647, %v441
    %vm489 = vcmp.lt.f32.partialorder %v488, 0.0004427343
    %v490 = vsel %vm489, %v487, %v484
    %v491 = vadd.f32 %v443, 1.0
    %v492 = vlog2.pop %v491
    %v493 = vmul.f32 %v492, 0.6931472
    %v494 = vmul.f32 -0.5, %v443
    %v495 = vadd.f32 %v494, 1.0
    %v496 = vmul.f32 %v495, %v443
    %v497 = vand.u32 2147483647, %v443
    %vm498 = vcmp.lt.f32.partialorder %v497, 0.0004427343
    %v499 = vsel %vm498, %v496, %v493
    %v500 = vadd.f32 %v445, 1.0
    %v501 = vlog2.pop %v500
    %v502 = vmul.f32 %v501, 0.6931472
    %v503 = vmul.f32 -0.5, %v445
    %v504 = vadd.f32 %v503, 1.0
    %v505 = vmul.f32 %v504, %v445
    %v506 = vand.u32 2147483647, %v445
    %vm507 = vcmp.lt.f32.partialorder %v506, 0.0004427343
    %v508 = vsel %vm507, %v505, %v502
    %v509 = vadd.f32 %v411, %v454
    %v510 = vadd.f32 %v412, %v463
    %v511 = vadd.f32 %v413, %v472
    %v512 = vadd.f32 %v414, %v481
    %v513 = vadd.f32 %v415, %v490
    %v514 = vadd.f32 %v416, %v499
    %v515 = vadd.f32 %v417, %v508
    %vm516 = vcmp.ge.f32.partialorder %v341, 0.0
    %vm517 = vcmp.ge.f32.partialorder %v342, 0.0
    %vm518 = vcmp.ge.f32.partialorder %v343, 0.0
    %vm519 = vcmp.ge.f32.partialorder %v344, 0.0
    %vm520 = vcmp.ge.f32.partialorder %v345, 0.0
    %vm521 = vcmp.ge.f32.partialorder %v346, 0.0
    %vm522 = vcmp.ge.f32.partialorder %v347, 0.0
    %v523 = vsel %vm516, 1, 0
    %v524 = vsel %vm517, 1, 0
    %v525 = vsel %vm518, 1, 0
    %v526 = vsel %vm519, 1, 0
    %v527 = vsel %vm520, 1, 0
    %v528 = vsel %vm521, 1, 0
    %v529 = vsel %vm522, 1, 0
    %v530 = vcvt.s32.f32 %v523
    %v531 = vcvt.s32.f32 %v524
    %v532 = vcvt.s32.f32 %v525
    %v533 = vcvt.s32.f32 %v526
    %v534 = vcvt.s32.f32 %v527
    %v535 = vcvt.s32.f32 %v528
    %v536 = vcvt.s32.f32 %v529
    %544 = vrot.lane.b32.xlu0 %v376, 1
    %v545 = vpop.permute.xlu0 %544
    %546 = vrot.lane.b32.xlu0 %v377, 1
    %v547 = vpop.permute.xlu0 %546
    %548 = vrot.lane.b32.xlu0 %v378, 1
    %v549 = vpop.permute.xlu0 %548
    %550 = vrot.lane.b32.xlu0 %v379, 1
    %v551 = vpop.permute.xlu0 %550
    %552 = vrot.lane.b32.xlu0 %v380, 1
    %v553 = vpop.permute.xlu0 %552
    %554 = vrot.lane.b32.xlu0 %v381, 1
    %v555 = vpop.permute.xlu0 %554
    %556 = vrot.lane.b32.xlu0 %v382, 1
    %v557 = vpop.permute.xlu0 %556
    %vm558 = vcmask 7168
    %v559 = vsel %vm558, %v545, %v547
    %v560 = vsel %vm558, %v547, %v549
    %v561 = vsel %vm558, %v549, %v551
    %v562 = vsel %vm558, %v551, %v553
    %v563 = vsel %vm558, %v553, %v555
    %v564 = vsel %vm558, %v555, %v557
    %v572 = vsel %vm558, 0.0, %v545
    %v573 = vadd.f32 %v376, %v572
    %v574 = vadd.f32 %v377, %v559
    %v575 = vadd.f32 %v378, %v560
    %v576 = vadd.f32 %v379, %v561
    %v577 = vadd.f32 %v380, %v562
    %v578 = vadd.f32 %v381, %v563
    %v579 = vadd.f32 %v382, %v564
    %587 = vrot.lane.b32.xlu0 %v573, 2
    %v588 = vpop.permute.xlu0 %587
    %589 = vrot.lane.b32.xlu0 %v574, 2
    %v590 = vpop.permute.xlu0 %589
    %591 = vrot.lane.b32.xlu0 %v575, 2
    %v592 = vpop.permute.xlu0 %591
    %593 = vrot.lane.b32.xlu0 %v576, 2
    %v594 = vpop.permute.xlu0 %593
    %595 = vrot.lane.b32.xlu0 %v577, 2
    %v596 = vpop.permute.xlu0 %595
    %597 = vrot.lane.b32.xlu0 %v578, 2
    %v598 = vpop.permute.xlu0 %597
    %599 = vrot.lane.b32.xlu0 %v579, 2
    %v600 = vpop.permute.xlu0 %599
    %vm601 = vcmask 15360
    %v602 = vsel %vm601, %v588, %v590
    %v603 = vsel %vm601, %v590, %v592
    %v604 = vsel %vm601, %v592, %v594
    %v605 = vsel %vm601, %v594, %v596
    %v606 = vsel %vm601, %v596, %v598
    %v607 = vsel %vm601, %v598, %v600
    %v615 = vsel %vm601, 0.0, %v588
    %v616 = vadd.f32 %v573, %v615
    %v617 = vadd.f32 %v574, %v602
    %v618 = vadd.f32 %v575, %v603
    %v619 = vadd.f32 %v576, %v604
    %v620 = vadd.f32 %v577, %v605
    %v621 = vadd.f32 %v578, %v606
    %v622 = vadd.f32 %v579, %v607
    %630 = vrot.lane.b32.xlu0 %v616, 4
    %v631 = vpop.permute.xlu0 %630
    %632 = vrot.lane.b32.xlu0 %v617, 4
    %v633 = vpop.permute.xlu0 %632
    %634 = vrot.lane.b32.xlu0 %v618, 4
    %v635 = vpop.permute.xlu0 %634
    %636 = vrot.lane.b32.xlu0 %v619, 4
    %v637 = vpop.permute.xlu0 %636
    %638 = vrot.lane.b32.xlu0 %v620, 4
    %v639 = vpop.permute.xlu0 %638
    %640 = vrot.lane.b32.xlu0 %v621, 4
    %v641 = vpop.permute.xlu0 %640
    %642 = vrot.lane.b32.xlu0 %v622, 4
    %v643 = vpop.permute.xlu0 %642
    %vm644 = vcmask 31744
    %v645 = vsel %vm644, %v631, %v633
    %v646 = vsel %vm644, %v633, %v635
    %v647 = vsel %vm644, %v635, %v637
    %v648 = vsel %vm644, %v637, %v639
    %v649 = vsel %vm644, %v639, %v641
    %v650 = vsel %vm644, %v641, %v643
    %v658 = vsel %vm644, 0.0, %v631
    %v659 = vadd.f32 %v616, %v658
    %v660 = vadd.f32 %v617, %v645
    %v661 = vadd.f32 %v618, %v646
    %v662 = vadd.f32 %v619, %v647
    %v663 = vadd.f32 %v620, %v648
    %v664 = vadd.f32 %v621, %v649
    %v665 = vadd.f32 %v622, %v650
    %v666 = vsub.f32 %v341, %v348
    %v667 = vsub.f32 %v342, %v349
    %v668 = vsub.f32 %v343, %v350
    %v669 = vsub.f32 %v344, %v351
    %v670 = vsub.f32 %v345, %v352
    %v671 = vsub.f32 %v346, %v353
    %v672 = vsub.f32 %v347, %v354
    %v673 = vand.u32 2147483647, %v666
    %v674 = vand.u32 2147483647, %v667
    %v675 = vand.u32 2147483647, %v668
    %v676 = vand.u32 2147483647, %v669
    %v677 = vand.u32 2147483647, %v670
    %v678 = vand.u32 2147483647, %v671
    %v679 = vand.u32 2147483647, %v672
    %vm680 = vcmp.lt.f32.partialorder %v673, 1.0
    %vm681 = vcmp.lt.f32.partialorder %v674, 1.0
    %vm682 = vcmp.lt.f32.partialorder %v675, 1.0
    %vm683 = vcmp.lt.f32.partialorder %v676, 1.0
    %vm684 = vcmp.lt.f32.partialorder %v677, 1.0
    %vm685 = vcmp.lt.f32.partialorder %v678, 1.0
    %vm686 = vcmp.lt.f32.partialorder %v679, 1.0
    %v687 = vmul.f32 %v666, 0.5
    %v688 = vmul.f32 %v667, 0.5
    %v689 = vmul.f32 %v668, 0.5
    %v690 = vmul.f32 %v669, 0.5
    %v691 = vmul.f32 %v670, 0.5
    %v692 = vmul.f32 %v671, 0.5
    %v693 = vmul.f32 %v672, 0.5
    %v694 = vmul.f32 %v687, %v666
    %v695 = vmul.f32 %v688, %v667
    %v696 = vmul.f32 %v689, %v668
    %v697 = vmul.f32 %v690, %v669
    %v698 = vmul.f32 %v691, %v670
    %v699 = vmul.f32 %v692, %v671
    %v700 = vmul.f32 %v693, %v672
    %v701 = vsub.f32 %v673, 0.5
    %v702 = vsub.f32 %v674, 0.5
    %v703 = vsub.f32 %v675, 0.5
    %v704 = vsub.f32 %v676, 0.5
    %v705 = vsub.f32 %v677, 0.5
    %v706 = vsub.f32 %v678, 0.5
    %v707 = vsub.f32 %v679, 0.5
    %v708 = vsel %vm680, %v694, %v701
    %v709 = vsel %vm681, %v695, %v702
    %v710 = vsel %vm682, %v696, %v703
    %v711 = vsel %vm683, %v697, %v704
    %v712 = vsel %vm684, %v698, %v705
    %v713 = vsel %vm685, %v699, %v706
    %v714 = vsel %vm686, %v700, %v707
    %v715 = vmul.f32 %v708, %v659
    %v716 = vmul.f32 %v709, %v660
    %v717 = vmul.f32 %v710, %v661
    %v718 = vmul.f32 %v711, %v662
    %v719 = vmul.f32 %v712, %v663
    %v720 = vmul.f32 %v713, %v664
    %v721 = vmul.f32 %v714, %v665
    %v722 = vsel %vm355, %v509, 0.0
    %v723 = vsel %vm356, %v510, 0.0
    %v724 = vsel %vm357, %v511, 0.0
    %v725 = vsel %vm358, %v512, 0.0
    %v726 = vsel %vm359, %v513, 0.0
    %v727 = vsel %vm360, %v514, 0.0
    %v728 = vsel %vm361, %v515, 0.0
    %v729 = vadd.f32 %v722, 0.0
    %v730 = vadd.f32 %v723, 0.0
    %v731 = vadd.f32 %v724, 0.0
    %v732 = vadd.f32 %v725, 0.0
    %v733 = vadd.f32 %v726, 0.0
    %v734 = vadd.f32 %v727, 0.0
    %v735 = vadd.f32 %v728, 0.0
    %v736 = vadd.f32 %v376, 0.0
    %v737 = vadd.f32 %v377, 0.0
    %v738 = vadd.f32 %v378, 0.0
    %v739 = vadd.f32 %v379, 0.0
    %v740 = vadd.f32 %v380, 0.0
    %v741 = vadd.f32 %v381, 0.0
    %v742 = vadd.f32 %v382, 0.0
    %v743 = vmul.f32 %v376, %v530
    %v744 = vmul.f32 %v377, %v531
    %v745 = vmul.f32 %v378, %v532
    %v746 = vmul.f32 %v379, %v533
    %v747 = vmul.f32 %v380, %v534
    %v748 = vmul.f32 %v381, %v535
    %v749 = vmul.f32 %v382, %v536
    %v750 = vadd.f32 %v743, 0.0
    %v751 = vadd.f32 %v744, 0.0
    %v752 = vadd.f32 %v745, 0.0
    %v753 = vadd.f32 %v746, 0.0
    %v754 = vadd.f32 %v747, 0.0
    %v755 = vadd.f32 %v748, 0.0
    %v756 = vadd.f32 %v749, 0.0
    %v757 = vsub.f32 %v509, %v341
    %v758 = vsub.f32 %v510, %v342
    %v759 = vsub.f32 %v511, %v343
    %v760 = vsub.f32 %v512, %v344
    %v761 = vsub.f32 %v513, %v345
    %v762 = vsub.f32 %v514, %v346
    %v763 = vsub.f32 %v515, %v347
    %v764 = vsel %vm362, %v757, 0.0
    %v765 = vsel %vm363, %v758, 0.0
    %v766 = vsel %vm364, %v759, 0.0
    %v767 = vsel %vm365, %v760, 0.0
    %v768 = vsel %vm366, %v761, 0.0
    %v769 = vsel %vm367, %v762, 0.0
    %v770 = vsel %vm368, %v763, 0.0
    %v771 = vadd.f32 %v764, 0.0
    %v772 = vadd.f32 %v765, 0.0
    %v773 = vadd.f32 %v766, 0.0
    %v774 = vadd.f32 %v767, 0.0
    %v775 = vadd.f32 %v768, 0.0
    %v776 = vadd.f32 %v769, 0.0
    %v777 = vadd.f32 %v770, 0.0
    %v778 = vadd.f32 %v390, 0.0
    %v779 = vadd.f32 %v391, 0.0
    %v780 = vadd.f32 %v392, 0.0
    %v781 = vadd.f32 %v393, 0.0
    %v782 = vadd.f32 %v394, 0.0
    %v783 = vadd.f32 %v395, 0.0
    %v784 = vadd.f32 %v396, 0.0
    %v785 = vmul.f32 %v390, %v530
    %v786 = vmul.f32 %v391, %v531
    %v787 = vmul.f32 %v392, %v532
    %v788 = vmul.f32 %v393, %v533
    %v789 = vmul.f32 %v394, %v534
    %v790 = vmul.f32 %v395, %v535
    %v791 = vmul.f32 %v396, %v536
    %v792 = vadd.f32 %v785, 0.0
    %v793 = vadd.f32 %v786, 0.0
    %v794 = vadd.f32 %v787, 0.0
    %v795 = vadd.f32 %v788, 0.0
    %v796 = vadd.f32 %v789, 0.0
    %v797 = vadd.f32 %v790, 0.0
    %v798 = vadd.f32 %v791, 0.0
    %v799 = vadd.f32 %v715, 0.0
    %v800 = vadd.f32 %v716, 0.0
    %v801 = vadd.f32 %v717, 0.0
    %v802 = vadd.f32 %v718, 0.0
    %v803 = vadd.f32 %v719, 0.0
    %v804 = vadd.f32 %v720, 0.0
    %v805 = vadd.f32 %v721, 0.0
    %813 = vrot.lane.b32.xlu0 %v736, 1
    %v814 = vpop.permute.xlu0 %813
    %815 = vrot.lane.b32.xlu0 %v737, 1
    %v816 = vpop.permute.xlu0 %815
    %817 = vrot.lane.b32.xlu0 %v738, 1
    %v818 = vpop.permute.xlu0 %817
    %819 = vrot.lane.b32.xlu0 %v739, 1
    %v820 = vpop.permute.xlu0 %819
    %821 = vrot.lane.b32.xlu0 %v740, 1
    %v822 = vpop.permute.xlu0 %821
    %823 = vrot.lane.b32.xlu0 %v741, 1
    %v824 = vpop.permute.xlu0 %823
    %825 = vrot.lane.b32.xlu0 %v742, 1
    %v826 = vpop.permute.xlu0 %825
    %v827 = vsel %vm558, %v814, %v816
    %v828 = vsel %vm558, %v816, %v818
    %v829 = vsel %vm558, %v818, %v820
    %v830 = vsel %vm558, %v820, %v822
    %v831 = vsel %vm558, %v822, %v824
    %v832 = vsel %vm558, %v824, %v826
    %v840 = vsel %vm558, 0.0, %v814
    %v841 = vadd.f32 %v729, %v840
    %v842 = vadd.f32 %v730, %v827
    %v843 = vadd.f32 %v731, %v828
    %v844 = vadd.f32 %v732, %v829
    %v845 = vadd.f32 %v733, %v830
    %v846 = vadd.f32 %v734, %v831
    %v847 = vadd.f32 %v735, %v832
    %855 = vrot.lane.b32.xlu0 %v750, 2
    %v856 = vpop.permute.xlu0 %855
    %857 = vrot.lane.b32.xlu0 %v751, 2
    %v858 = vpop.permute.xlu0 %857
    %859 = vrot.lane.b32.xlu0 %v752, 2
    %v860 = vpop.permute.xlu0 %859
    %861 = vrot.lane.b32.xlu0 %v753, 2
    %v862 = vpop.permute.xlu0 %861
    %863 = vrot.lane.b32.xlu0 %v754, 2
    %v864 = vpop.permute.xlu0 %863
    %865 = vrot.lane.b32.xlu0 %v755, 2
    %v866 = vpop.permute.xlu0 %865
    %867 = vrot.lane.b32.xlu0 %v756, 2
    %v868 = vpop.permute.xlu0 %867
    %v869 = vsel %vm601, %v856, %v858
    %v870 = vsel %vm601, %v858, %v860
    %v871 = vsel %vm601, %v860, %v862
    %v872 = vsel %vm601, %v862, %v864
    %v873 = vsel %vm601, %v864, %v866
    %v874 = vsel %vm601, %v866, %v868
    %v882 = vsel %vm601, 0.0, %v856
    %v883 = vadd.f32 %v841, %v882
    %v884 = vadd.f32 %v842, %v869
    %v885 = vadd.f32 %v843, %v870
    %v886 = vadd.f32 %v844, %v871
    %v887 = vadd.f32 %v845, %v872
    %v888 = vadd.f32 %v846, %v873
    %v889 = vadd.f32 %v847, %v874
    %897 = vrot.lane.b32.xlu0 %v771, 3
    %v898 = vpop.permute.xlu0 %897
    %899 = vrot.lane.b32.xlu0 %v772, 3
    %v900 = vpop.permute.xlu0 %899
    %901 = vrot.lane.b32.xlu0 %v773, 3
    %v902 = vpop.permute.xlu0 %901
    %903 = vrot.lane.b32.xlu0 %v774, 3
    %v904 = vpop.permute.xlu0 %903
    %905 = vrot.lane.b32.xlu0 %v775, 3
    %v906 = vpop.permute.xlu0 %905
    %907 = vrot.lane.b32.xlu0 %v776, 3
    %v908 = vpop.permute.xlu0 %907
    %909 = vrot.lane.b32.xlu0 %v777, 3
    %v910 = vpop.permute.xlu0 %909
    %vm911 = vcmask 23552
    %v912 = vsel %vm911, %v898, %v900
    %v913 = vsel %vm911, %v900, %v902
    %v914 = vsel %vm911, %v902, %v904
    %v915 = vsel %vm911, %v904, %v906
    %v916 = vsel %vm911, %v906, %v908
    %v917 = vsel %vm911, %v908, %v910
    %v925 = vsel %vm911, 0.0, %v898
    %v926 = vadd.f32 %v883, %v925
    %v927 = vadd.f32 %v884, %v912
    %v928 = vadd.f32 %v885, %v913
    %v929 = vadd.f32 %v886, %v914
    %v930 = vadd.f32 %v887, %v915
    %v931 = vadd.f32 %v888, %v916
    %v932 = vadd.f32 %v889, %v917
    %940 = vrot.lane.b32.xlu0 %v778, 4
    %v941 = vpop.permute.xlu0 %940
    %942 = vrot.lane.b32.xlu0 %v779, 4
    %v943 = vpop.permute.xlu0 %942
    %944 = vrot.lane.b32.xlu0 %v780, 4
    %v945 = vpop.permute.xlu0 %944
    %946 = vrot.lane.b32.xlu0 %v781, 4
    %v947 = vpop.permute.xlu0 %946
    %948 = vrot.lane.b32.xlu0 %v782, 4
    %v949 = vpop.permute.xlu0 %948
    %950 = vrot.lane.b32.xlu0 %v783, 4
    %v951 = vpop.permute.xlu0 %950
    %952 = vrot.lane.b32.xlu0 %v784, 4
    %v953 = vpop.permute.xlu0 %952
    %v954 = vsel %vm644, %v941, %v943
    %v955 = vsel %vm644, %v943, %v945
    %v956 = vsel %vm644, %v945, %v947
    %v957 = vsel %vm644, %v947, %v949
    %v958 = vsel %vm644, %v949, %v951
    %v959 = vsel %vm644, %v951, %v953
    %v967 = vsel %vm644, 0.0, %v941
    %v968 = vadd.f32 %v926, %v967
    %v969 = vadd.f32 %v927, %v954
    %v970 = vadd.f32 %v928, %v955
    %v971 = vadd.f32 %v929, %v956
    %v972 = vadd.f32 %v930, %v957
    %v973 = vadd.f32 %v931, %v958
    %v974 = vadd.f32 %v932, %v959
    %982 = vrot.lane.b32.xlu0 %v792, 5
    %v983 = vpop.permute.xlu0 %982
    %984 = vrot.lane.b32.xlu0 %v793, 5
    %v985 = vpop.permute.xlu0 %984
    %986 = vrot.lane.b32.xlu0 %v794, 5
    %v987 = vpop.permute.xlu0 %986
    %988 = vrot.lane.b32.xlu0 %v795, 5
    %v989 = vpop.permute.xlu0 %988
    %990 = vrot.lane.b32.xlu0 %v796, 5
    %v991 = vpop.permute.xlu0 %990
    %992 = vrot.lane.b32.xlu0 %v797, 5
    %v993 = vpop.permute.xlu0 %992
    %994 = vrot.lane.b32.xlu0 %v798, 5
    %v995 = vpop.permute.xlu0 %994
    %vm996 = vcmask 39936
    %v997 = vsel %vm996, %v983, %v985
    %v998 = vsel %vm996, %v985, %v987
    %v999 = vsel %vm996, %v987, %v989
    %v1000 = vsel %vm996, %v989, %v991
    %v1001 = vsel %vm996, %v991, %v993
    %v1002 = vsel %vm996, %v993, %v995
    %v1010 = vsel %vm996, 0.0, %v983
    %v1011 = vadd.f32 %v968, %v1010
    %v1012 = vadd.f32 %v969, %v997
    %v1013 = vadd.f32 %v970, %v998
    %v1014 = vadd.f32 %v971, %v999
    %v1015 = vadd.f32 %v972, %v1000
    %v1016 = vadd.f32 %v973, %v1001
    %v1017 = vadd.f32 %v974, %v1002
    %p1018 = scmp.eq.s32.totalorder 0, 0
    // Predicated region
    $region18: #{tpu_custom_call.1} parent=1 // pred_check
      %p1019 = pneg %p1018
    $region19: #{tpu_custom_call.1} parent=1 // pred_check_branch
      %1021 = sbr.rel (%p1019) target = $region21
    $region20: #{tpu_custom_call.1} parent=1 // pred_region
      %1022 = vst [vmem:[#allocation7] sm:$0xff] 0.0
      %1023 = vst [vmem:[#allocation7 + $0x8] sm:$0xff] 0.0
      %1024 = vst [vmem:[#allocation7 + $0x10] sm:$0xff] 0.0
      %1025 = vst [vmem:[#allocation7 + $0x18] sm:$0xff] 0.0
      %1026 = vst [vmem:[#allocation7 + $0x20] sm:$0xff] 0.0
      %1027 = vst [vmem:[#allocation7 + $0x28] sm:$0xff] 0.0
      %1028 = vst [vmem:[#allocation7 + $0x30] sm:$0xff] 0.0
      %1029 = vst [vmem:[#allocation8] sm:$0xff] 0.0
      %1030 = vst [vmem:[#allocation8 + $0x8] sm:$0xff] 0.0
      %1031 = vst [vmem:[#allocation8 + $0x10] sm:$0xff] 0.0
      %1032 = vst [vmem:[#allocation8 + $0x18] sm:$0xff] 0.0
      %1033 = vst [vmem:[#allocation8 + $0x20] sm:$0xff] 0.0
      %1034 = vst [vmem:[#allocation8 + $0x28] sm:$0xff] 0.0
      %1035 = vst [vmem:[#allocation8 + $0x30] sm:$0xff] 0.0
    $region21: #{tpu_custom_call.1} parent=1 // pred_fallthru
      _
    %v1036 = vld [vmem:[#allocation7] sm:$0xff]
    %v1037 = vld [vmem:[#allocation7 + $0x8] sm:$0xff]
    %v1038 = vld [vmem:[#allocation7 + $0x10] sm:$0xff]
    %v1039 = vld [vmem:[#allocation7 + $0x18] sm:$0xff]
    %v1040 = vld [vmem:[#allocation7 + $0x20] sm:$0xff]
    %v1041 = vld [vmem:[#allocation7 + $0x28] sm:$0xff]
    %v1042 = vld [vmem:[#allocation7 + $0x30] sm:$0xff]
    %v1043 = vadd.f32 %v1036, %v1011
    %v1044 = vadd.f32 %v1037, %v1012
    %v1045 = vadd.f32 %v1038, %v1013
    %v1046 = vadd.f32 %v1039, %v1014
    %v1047 = vadd.f32 %v1040, %v1015
    %v1048 = vadd.f32 %v1041, %v1016
    %v1049 = vadd.f32 %v1042, %v1017
    %1050 = vst [vmem:[#allocation7] sm:$0xff] %v1043
    %1051 = vst [vmem:[#allocation7 + $0x8] sm:$0xff] %v1044
    %1052 = vst [vmem:[#allocation7 + $0x10] sm:$0xff] %v1045
    %1053 = vst [vmem:[#allocation7 + $0x18] sm:$0xff] %v1046
    %1054 = vst [vmem:[#allocation7 + $0x20] sm:$0xff] %v1047
    %1055 = vst [vmem:[#allocation7 + $0x28] sm:$0xff] %v1048
    %1056 = vst [vmem:[#allocation7 + $0x30] sm:$0xff] %v1049
    %v1057 = vld [vmem:[#allocation8] sm:$0xff]
    %v1058 = vld [vmem:[#allocation8 + $0x8] sm:$0xff]
    %v1059 = vld [vmem:[#allocation8 + $0x10] sm:$0xff]
    %v1060 = vld [vmem:[#allocation8 + $0x18] sm:$0xff]
    %v1061 = vld [vmem:[#allocation8 + $0x20] sm:$0xff]
    %v1062 = vld [vmem:[#allocation8 + $0x28] sm:$0xff]
    %v1063 = vld [vmem:[#allocation8 + $0x30] sm:$0xff]
    %v1064 = vadd.f32 %v1057, %v799
    %v1065 = vadd.f32 %v1058, %v800
    %v1066 = vadd.f32 %v1059, %v801
    %v1067 = vadd.f32 %v1060, %v802
    %v1068 = vadd.f32 %v1061, %v803
    %v1069 = vadd.f32 %v1062, %v804
    %v1070 = vadd.f32 %v1063, %v805
    %1071 = vst [vmem:[#allocation8] sm:$0xff] %v1064
    %1072 = vst [vmem:[#allocation8 + $0x8] sm:$0xff] %v1065
    %1073 = vst [vmem:[#allocation8 + $0x10] sm:$0xff] %v1066
    %1074 = vst [vmem:[#allocation8 + $0x18] sm:$0xff] %v1067
    %1075 = vst [vmem:[#allocation8 + $0x20] sm:$0xff] %v1068
    %1076 = vst [vmem:[#allocation8 + $0x28] sm:$0xff] %v1069
    %1077 = vst [vmem:[#allocation8 + $0x30] sm:$0xff] %v1070
    // Predicated region
    $region22: #{tpu_custom_call.1} parent=1 // pred_check
      _
    $region23: #{tpu_custom_call.1} parent=1 // pred_check_branch
      %1079 = sbr.rel (0) target = $region25
    $region24: #{tpu_custom_call.1} parent=1 // pred_region
      %1081 = vsyncadd [#allocation4], 0
      %s1083 = sshll.u32 [#allocation7], 4
      %s1084 = int_to_ptr.vmem [resolvable:$true] %s1083
      %s1085 = sshll.u32 %s2, 4
      %s1086 = int_to_ptr.hbm [resolvable:$true] %s1085
      %1088 = dma.vmem_to_hbm [thread:$0]  %s1084, 896, %s1086, [#allocation4]
    $region25: #{tpu_custom_call.1} parent=1 // pred_fallthru
      _
    // Predicated region
    $region26: #{tpu_custom_call.1} parent=1 // pred_check
      _
    $region27: #{tpu_custom_call.1} parent=1 // pred_check_branch
      %1090 = sbr.rel (0) target = $region29
    $region28: #{tpu_custom_call.1} parent=1 // pred_region
      %1092 = vsyncadd [#allocation9], 0
      %s1094 = sshll.u32 [#allocation8], 4
      %s1095 = int_to_ptr.vmem [resolvable:$true] %s1094
      %s1096 = sshll.u32 %s3, 4
      %s1097 = int_to_ptr.hbm [resolvable:$true] %s1096
      %1099 = dma.vmem_to_hbm [thread:$0]  %s1095, 896, %s1097, [#allocation9]
    $region29: #{tpu_custom_call.1} parent=1 // pred_fallthru
      _
    // Predicated region
    $region30: #{tpu_custom_call.1} parent=1 // pred_check
      _
    $region31: #{tpu_custom_call.1} parent=1 // pred_check_branch
      %1101 = sbr.rel (0) target = $region33
    $region32: #{tpu_custom_call.1} parent=1 // pred_region
      %1103 = dma.done [#allocation4], 896
    $region33: #{tpu_custom_call.1} parent=1 // pred_fallthru
      _
    // Predicated region
    $region34: #{tpu_custom_call.1} parent=1 // pred_check
      _
    $region35: #{tpu_custom_call.1} parent=1 // pred_check_branch
      %1105 = sbr.rel (0) target = $region37
    $region36: #{tpu_custom_call.1} parent=1 // pred_region
      %1107 = dma.done [#allocation9], 896
    $region37: #{tpu_custom_call.1} parent=1 // pred_fallthru
      _
    %1108 = vsyncpa [#allocation3], 1
    %1109 = vsyncpa [#allocation6], 1
    %1110 = vsyncpa [#allocation4], 1
    %1111 = vsyncpa [#allocation9], 1

</llo_original>
